<compile_context>
chip_gen: v6e
topology: v6e:2x2x1
jax: 0.10.0
libtpu: 0.0.40
codegen_flags: <defaults>
</compile_context>

<pallas_src>
import math
import numpy as np
import jax
import jax.numpy as jnp
from jax.experimental import pallas as pl
from jax.experimental.pallas import tpu as pltpu


# ----------------------- DCT buffer (deterministic, host-side glue) -----------------------
def get_ld_dct(i, freq, L):
    result = math.cos(math.pi * freq * (i + 0.5) / L)
    if freq == 0:
        return result
    return result * math.sqrt(2)


def get_dct_weights(width, height, channel, fidx_u, fidx_v):
    # Same construction as the PyTorch buffer, minus the leading broadcast dim.
    w = np.zeros((channel, width, height), dtype=np.float32)
    c_part = channel // len(fidx_u)
    for i, (u_x, v_y) in enumerate(zip(fidx_u, fidx_v)):
        for t_x in range(width):
            for t_y in range(height):
                val = get_ld_dct(t_x, u_x, width) * get_ld_dct(t_y, v_y, height)
                w[i * c_part:(i + 1) * c_part, t_x, t_y] = val
    return jnp.asarray(w)


# ----------------------------------- Pallas kernel ----------------------------------------
def fca_kernel(x_ref, dct_ref, w1t_ref, w2t_ref, o_ref):
    # x_ref/o_ref: (B, C, HW)   dct_ref: (C, HW)   w1t_ref: (C, Cr)   w2t_ref: (Cr, C)
    x = x_ref[...]                                      # (B, C, HW)
    dct = dct_ref[...]                                  # (C, HW)

    # Weighted spatial reduction ("2D DCT") -> per-(batch, channel) scalar.
    y = jnp.sum(x * dct[None, :, :], axis=-1)           # (B, C)

    # Squeeze-excite FC batched over the whole block (two block-level matmuls).
    # PyTorch Linear is y @ W.T; weights arrive pre-transposed as (in, out).
    h = jnp.dot(y, w1t_ref[...], preferred_element_type=jnp.float32)   # (B, Cr)
    h = jnp.maximum(h, 0.0)
    z = jnp.dot(h, w2t_ref[...], preferred_element_type=jnp.float32)   # (B, C)
    s = jax.nn.sigmoid(z)                               # EUP exp + reciprocal

    # Broadcast channel attention back over the spatial (lane) axis.
    o_ref[...] = x * s[:, :, None]


def fca_layer(x, dct_w, w1, w2, *, batch_block=None):
    """x: (N, C, H, W) f32, dct_w: (C, H, W), w1: (Cr, C), w2: (C, Cr)."""
    n, c, hgt, wid = x.shape
    hw = hgt * wid
    cr = w1.shape[0]

    x_flat = x.reshape(n, c, hw)
    dct_flat = dct_w.reshape(c, hw)
    w1t = jnp.transpose(w1)        # (C, Cr)  -- transpose once on host, not per step
    w2t = jnp.transpose(w2)        # (Cr, C)

    # Pick the batch block: target a few-MiB x tile per grid step (kernel is HBM-bound;
    # tiny per-step blocks are dominated by ~0.35us/step overhead), while keeping the
    # double-buffered in+out (2 arrays x 2 buffers x tile) inside scoped-VMEM defaults.
    if batch_block is None:
        bytes_per_batch = c * hw * x.dtype.itemsize
        target_tile_bytes = 2 * 1024 * 1024
        batch_block = max(1, min(n, target_tile_bytes // max(1, bytes_per_batch)))
        # Keep >= 2 grid steps when possible so the "parallel" batch axis can feed
        # both TensorCores on v7x (megacore sharding).
        if n >= 2 and pl.cdiv(n, batch_block) < 2:
            batch_block = pl.cdiv(n, 2)
    b = int(batch_block)

    n_blocks = pl.cdiv(n, b)
    n_pad = n_blocks * b
    if n_pad != n:
        # Zero-padded rows are harmless: y=0 -> s=0.5 -> out = 0 * 0.5 = 0; sliced off below.
        x_flat = jnp.pad(x_flat, ((0, n_pad - n), (0, 0), (0, 0)))

    out_flat = pl.pallas_call(
        fca_kernel,
        out_shape=jax.ShapeDtypeStruct((n_pad, c, hw), x.dtype),
        grid_spec=pltpu.PrefetchScalarGridSpec(
            num_scalar_prefetch=0,
            grid=(n_blocks,),
            in_specs=[
                pl.BlockSpec((b, c, hw), lambda i: (i, 0, 0)),   # x, B batches per step
                pl.BlockSpec((c, hw), lambda i: (0, 0)),         # dct weights (VMEM-resident)
                pl.BlockSpec((c, cr), lambda i: (0, 0)),         # fc1 weight^T (shared)
                pl.BlockSpec((cr, c), lambda i: (0, 0)),         # fc2 weight^T (shared)
            ],
            out_specs=pl.BlockSpec((b, c, hw), lambda i: (i, 0, 0)),
        ),
        compiler_params=pltpu.CompilerParams(
            dimension_semantics=("parallel",)),
    )(x_flat, dct_flat, w1t, w2t)

    if n_pad != n:
        out_flat = out_flat[:n]
    return out_flat.reshape(n, c, hgt, wid)


# ------------------------------------ reference -------------------------------------------
def fca_reference(x, dct_w, w1, w2):
    y = jnp.sum(x * dct_w[None], axis=(2, 3))                  # (N, C)
    h = jnp.maximum(y @ w1.T, 0.0)                             # (N, Cr)
    s = jax.nn.sigmoid(h @ w2.T)                               # (N, C)
    return x * s[:, :, None, None]


if __name__ == "__main__":
    # Small shapes consistent with the module: N=2, C=32, H=W=16, reduction=16 -> Cr=2.
    N, C, H, W = 2, 32, 16, 16
    reduction = 16
    Cr = C // reduction

    # 4 frequency pairs (len must divide C), analogous to the FcaNet fidx lists.
    fidx_u = [0, 1, 2, 3]
    fidx_v = [0, 0, 1, 1]
    dct_w = get_dct_weights(H, W, C, fidx_u, fidx_v)           # (C, H, W)

    key = jax.random.PRNGKey(0)
    kx, k1, k2 = jax.random.split(key, 3)
    x = jax.random.normal(kx, (N, C, H, W), dtype=jnp.float32)
    # Deterministic synthetic Linear weights (no bias), PyTorch shapes: (out, in).
    w1 = 0.1 * jax.random.normal(k1, (Cr, C), dtype=jnp.float32)   # fc1: C -> Cr
    w2 = 0.1 * jax.random.normal(k2, (C, Cr), dtype=jnp.float32)   # fc2: Cr -> C

    out = fca_layer(x, dct_w, w1, w2)
    out = jax.block_until_ready(out)

    ref = fca_reference(x, dct_w, w1, w2)
    np.testing.assert_allclose(np.asarray(out), np.asarray(ref), rtol=1e-5, atol=1e-5)

    print("KERNEL_OK")
</pallas_src>

<mosaic_0001>
module attributes {stable_mosaic.version = 11 : i64} {
  func.func @fca_kernel(%arg0: i32, %arg1: memref<1x32x256xf32, #tpu.memory_space<vmem>>, %arg2: memref<32x256xf32, #tpu.memory_space<vmem>>, %arg3: memref<32x2xf32, #tpu.memory_space<vmem>>, %arg4: memref<2x32xf32, #tpu.memory_space<vmem>>, %arg5: memref<1x32x256xf32, #tpu.memory_space<vmem>>) attributes {dimension_semantics = [#tpu.dimension_semantics<parallel>], iteration_bounds = array<i64: 2>, scalar_prefetch = 0 : i64, scratch_operands = 0 : i64, tpu.core_type = #tpu.core_type<tc>, window_params = [{transform_indices = @transform_0, window_bounds = array<i64: 1, 32, 256>}, {pipeline_mode = #tpu.pipeline_mode<synchronous>, transform_indices = @transform_1, window_bounds = array<i64: 32, 256>}, {pipeline_mode = #tpu.pipeline_mode<synchronous>, transform_indices = @transform_2, window_bounds = array<i64: 32, 2>}, {pipeline_mode = #tpu.pipeline_mode<synchronous>, transform_indices = @transform_3, window_bounds = array<i64: 2, 32>}, {transform_indices = @transform_4, window_bounds = array<i64: 1, 32, 256>}]} {
    %c0 = arith.constant 0 : index
    %c0_0 = arith.constant 0 : index
    %c0_1 = arith.constant 0 : index
    %0 = vector.load %arg1[%c0, %c0_0, %c0_1] : memref<1x32x256xf32, #tpu.memory_space<vmem>>, vector<1x32x256xf32>
    %c0_2 = arith.constant 0 : index
    %c0_3 = arith.constant 0 : index
    %1 = vector.load %arg2[%c0_2, %c0_3] : memref<32x256xf32, #tpu.memory_space<vmem>>, vector<32x256xf32>
    %2 = vector.shape_cast %1 : vector<32x256xf32> to vector<1x32x256xf32>
    %3 = arith.mulf %0, %2 : vector<1x32x256xf32>
    %cst = arith.constant dense<0.000000e+00> : vector<1x32xf32>
    %4 = vector.multi_reduction <add>, %3, %cst [2] : vector<1x32x256xf32> to vector<1x32xf32>
    %c0_4 = arith.constant 0 : index
    %c0_5 = arith.constant 0 : index
    %5 = vector.load %arg3[%c0_4, %c0_5] : memref<32x2xf32, #tpu.memory_space<vmem>>, vector<32x2xf32>
    %cst_6 = arith.constant dense<0.000000e+00> : vector<1x2xf32>
    %6 = tpu.matmul %4, %5, %cst_6 {dimension_numbers = #tpu.dot_dimension_numbers<[1], [0], [0], [1], [0, 0, 1, 1], [], []>} : vector<1x32xf32>, vector<32x2xf32>, vector<1x2xf32> -> vector<1x2xf32>
    %cst_7 = arith.constant 0.000000e+00 : f32
    %7 = vector.broadcast %cst_7 : f32 to vector<1x2xf32>
    %8 = arith.maximumf %6, %7 : vector<1x2xf32>
    %c0_8 = arith.constant 0 : index
    %c0_9 = arith.constant 0 : index
    %9 = vector.load %arg4[%c0_8, %c0_9] : memref<2x32xf32, #tpu.memory_space<vmem>>, vector<2x32xf32>
    %cst_10 = arith.constant dense<0.000000e+00> : vector<1x32xf32>
    %10 = tpu.matmul %8, %9, %cst_10 {dimension_numbers = #tpu.dot_dimension_numbers<[1], [0], [0], [1], [0, 0, 1, 1], [], []>} : vector<1x2xf32>, vector<2x32xf32>, vector<1x32xf32> -> vector<1x32xf32>
    %11 = arith.negf %10 : vector<1x32xf32>
    %12 = math.exp %11 : vector<1x32xf32>
    %cst_11 = arith.constant 1.000000e+00 : f32
    %13 = vector.broadcast %cst_11 : f32 to vector<1x32xf32>
    %14 = arith.addf %13, %12 : vector<1x32xf32>
    %15 = arith.divf %13, %14 : vector<1x32xf32>
    %16 = vector.shape_cast %15 : vector<1x32xf32> to vector<1x32x1xf32>
    %17 = vector.broadcast %16 : vector<1x32x1xf32> to vector<1x32x256xf32>
    %18 = arith.mulf %0, %17 : vector<1x32x256xf32>
    %c0_12 = arith.constant 0 : index
    %c0_13 = arith.constant 0 : index
    %c0_14 = arith.constant 0 : index
    %19 = vector.load %arg5[%c0_12, %c0_13, %c0_14] : memref<1x32x256xf32, #tpu.memory_space<vmem>>, vector<1x32x256xf32>
    tpu.vector_store %arg5[%c0_12, %c0_13, %c0_14], %18 {strides = array<i32>} : memref<1x32x256xf32, #tpu.memory_space<vmem>>, vector<1x32x256xf32>,
    return
  }
  func.func @transform_0(%arg0: i32) -> (i32, i32, i32) {
    %c0_i32 = arith.constant 0 : i32
    %c0_i32_0 = arith.constant 0 : i32
    %c0_i32_1 = arith.constant 0 : i32
    return %arg0, %c0_i32, %c0_i32_0 : i32, i32, i32
  }
  func.func @transform_1(%arg0: i32) -> (i32, i32) {
    %c0_i32 = arith.constant 0 : i32
    %c0_i32_0 = arith.constant 0 : i32
    %c0_i32_1 = arith.constant 0 : i32
    return %c0_i32, %c0_i32_0 : i32, i32
  }
  func.func @transform_2(%arg0: i32) -> (i32, i32) {
    %c0_i32 = arith.constant 0 : i32
    %c0_i32_0 = arith.constant 0 : i32
    %c0_i32_1 = arith.constant 0 : i32
    return %c0_i32, %c0_i32_0 : i32, i32
  }
  func.func @transform_3(%arg0: i32) -> (i32, i32) {
    %c0_i32 = arith.constant 0 : i32
    %c0_i32_0 = arith.constant 0 : i32
    %c0_i32_1 = arith.constant 0 : i32
    return %c0_i32, %c0_i32_0 : i32, i32
  }
  func.func @transform_4(%arg0: i32) -> (i32, i32, i32) {
    %c0_i32 = arith.constant 0 : i32
    %c0_i32_0 = arith.constant 0 : i32
    %c0_i32_1 = arith.constant 0 : i32
    return %arg0, %c0_i32, %c0_i32_0 : i32, i32, i32
  }
}

</mosaic_0001>

<llo_original>
// kernel: tpu_custom_call.1
$region0: #{tpu_custom_call.1}
  #allocation0 [shape = 'u32[]', space=smem, size = 0x4, offset = 0x4, fixed_abs, tag = 'smem constant byte address 0x4 - core index']
  #allocation1 [shape = 'u32[144,128]{1,0:T(1,128)}', space=vmem, size = 0x12000, scoped, tag = 'internal scratch']
  %s0 = inlined_call_operand.hbm [shape: f32[2,32,256], index: 0, kind: input, shape index: {}]
  %s1 = inlined_call_operand.hbm [shape: f32[32,256], index: 1, kind: input, shape index: {}]
  %s2 = inlined_call_operand.vmem [shape: f32[32,2], index: 2, kind: input, shape index: {}]
  %s3 = inlined_call_operand.vmem [shape: f32[2,32], index: 3, kind: input, shape index: {}]
  %s4 = inlined_call_operand.hbm [shape: f32[2,32,256], index: 4, kind: output, shape index: {}]
  %s5 = sld [smem:[#allocation0]]
  $region57: #{tpu_custom_call.1} parent=0
    _
  %s7 = ssub.s32 1, %s5
  %s8 = scalar_select 0, %s7, %s5
  $region1: #{tpu_custom_call.1} parent=0
    #allocation2 [shape = 'u8[65536]{0}', space=vmem, size = 0x10000, scoped, tag = 'input window, operand 0']
    #allocation3 [shape = 's32[2]{0}', space=sflag, size = 0x8, scoped, tag = 'scoped memory for tpu_custom_call.1']
    #allocation4 [shape = 's32[2]{0}', space=sflag, size = 0x8, scoped, tag = 'scoped memory for tpu_custom_call.1']
    #allocation5 [shape = 'u8[32768]{0}', space=vmem, size = 0x8000, scoped, tag = 'input window, operand 1, single buffered']
    #allocation6 [shape = 's32[1]{0}', space=sflag, size = 0x4, scoped, tag = 'scoped memory for tpu_custom_call.1']
    #allocation7 [shape = 'u8[65536]{0}', space=vmem, size = 0x10000, scoped, tag = 'output window, operand 0']
    %9 = vsyncpa [#allocation3], 0
    %s10 = scalar_lea.sflag [#allocation3], 1
    %11 = vsyncpa %s10, 0
    %12 = vsyncpa [#allocation6], 0
    %13 = vsyncpa [#allocation4], 0
    %s14 = scalar_lea.sflag [#allocation4], 1
    %15 = vsyncpa %s14, 0
    loop: start=0, step=1, limit=4
    $region2: #{tpu_custom_call.1} parent=1 // loop_pre_header
      _
    $region3: #{tpu_custom_call.1} parent=1 // loop_header
      %s17 = sphi 0, %s21
      %p18 = scmp.ge.s32.totalorder %s17, 4
      %s27 = sphi 0, %s29
      %s30 = sphi 0, %s27
      %s31 = sphi 0, %s30
      %s47 = sphi 0, %s31
      %s51 = sphi 0, %s51
      %s53 = sphi 0, %s51
      %s54 = sphi 0, %s53
      %s68 = sphi 0, %s54
      %s72 = sphi 0, %s72
      %s74 = sphi 0, %s72
      %s75 = sphi 0, %s74
      %s89 = sphi 0, %s75
      %s93 = sphi 0, %s93
      %s95 = sphi 0, %s93
      %s96 = sphi 0, %s95
      %s110 = sphi 0, %s96
      %s116 = sphi 0, %s118
      %s119 = sphi 0, %s116
      %s120 = sphi 0, %s119
      %s136 = sphi 0, %s120
    $region4: #{tpu_custom_call.1} parent=1 // loop_header_branch
      %20 = sbr.rel (%p18) target = $region8
    $region5: #{tpu_custom_call.1} parent=1 // loop_body
      %s22 = ssub.s32 %s17, 1
      %s23 = ssub.s32 %s17, 2
      %s24 = sadd.s32 %s17, 1
      %s25 = ssub.s32 %s17, %s24
      %p26 = scmp.eq.s32.totalorder %s25, 0
      %s28 = sadd.s32 %s27, 1
      %s29 = scalar_select %p26, %s27, %s28
      %p32 = pneg %p26
      %p33 = scmp.eq.s32.totalorder %s17, 1
      %p34 = por %p32, %p33
      %p35 = scmp.ne.s32.totalorder %s27, %s30
      %p36 = scmp.eq.s32.totalorder %s17, 0
      %p37 = por %p35, %p36
      %p38 = scmp.ne.s32.totalorder %s27, %s30
      %p39 = scmp.eq.s32.totalorder %s22, 1
      %p40 = por %p38, %p39
      %p41 = scmp.ne.s32.totalorder %s30, %s31
      %p42 = scmp.eq.s32.totalorder %s22, 0
      %p43 = por %p41, %p42
      %p44 = scmp.ne.s32.totalorder %s30, %s31
      %p45 = scmp.eq.s32.totalorder %s23, 1
      %p46 = por %p44, %p45
      %p48 = scmp.ne.s32.totalorder %s31, %s47
      %p49 = scmp.eq.s32.totalorder %s23, 0
      %p50 = por %p48, %p49
      %s52 = sadd.s32 %s51, 1
      %p55 = scmp.eq.s32.totalorder %s17, 1
      %p56 = scmp.ne.s32.totalorder %s51, %s53
      %p57 = scmp.eq.s32.totalorder %s17, 0
      %p58 = por %p56, %p57
      %p59 = scmp.ne.s32.totalorder %s51, %s53
      %p60 = scmp.eq.s32.totalorder %s22, 1
      %p61 = por %p59, %p60
      %p62 = scmp.ne.s32.totalorder %s53, %s54
      %p63 = scmp.eq.s32.totalorder %s22, 0
      %p64 = por %p62, %p63
      %p65 = scmp.ne.s32.totalorder %s53, %s54
      %p66 = scmp.eq.s32.totalorder %s23, 1
      %p67 = por %p65, %p66
      %p69 = scmp.ne.s32.totalorder %s54, %s68
      %p70 = scmp.eq.s32.totalorder %s23, 0
      %p71 = por %p69, %p70
      %s73 = sadd.s32 %s72, 1
      %p76 = scmp.eq.s32.totalorder %s17, 1
      %p77 = scmp.ne.s32.totalorder %s72, %s74
      %p78 = scmp.eq.s32.totalorder %s17, 0
      %p79 = por %p77, %p78
      %p80 = scmp.ne.s32.totalorder %s72, %s74
      %p81 = scmp.eq.s32.totalorder %s22, 1
      %p82 = por %p80, %p81
      %p83 = scmp.ne.s32.totalorder %s74, %s75
      %p84 = scmp.eq.s32.totalorder %s22, 0
      %p85 = por %p83, %p84
      %p86 = scmp.ne.s32.totalorder %s74, %s75
      %p87 = scmp.eq.s32.totalorder %s23, 1
      %p88 = por %p86, %p87
      %p90 = scmp.ne.s32.totalorder %s75, %s89
      %p91 = scmp.eq.s32.totalorder %s23, 0
      %p92 = por %p90, %p91
      %s94 = sadd.s32 %s93, 1
      %p97 = scmp.eq.s32.totalorder %s17, 1
      %p98 = scmp.ne.s32.totalorder %s93, %s95
      %p99 = scmp.eq.s32.totalorder %s17, 0
      %p100 = por %p98, %p99
      %p101 = scmp.ne.s32.totalorder %s93, %s95
      %p102 = scmp.eq.s32.totalorder %s22, 1
      %p103 = por %p101, %p102
      %p104 = scmp.ne.s32.totalorder %s95, %s96
      %p105 = scmp.eq.s32.totalorder %s22, 0
      %p106 = por %p104, %p105
      %p107 = scmp.ne.s32.totalorder %s95, %s96
      %p108 = scmp.eq.s32.totalorder %s23, 1
      %p109 = por %p107, %p108
      %p111 = scmp.ne.s32.totalorder %s96, %s110
      %p112 = scmp.eq.s32.totalorder %s23, 0
      %p113 = por %p111, %p112
      %s114 = ssub.s32 %s17, %s24
      %p115 = scmp.eq.s32.totalorder %s114, 0
      %s117 = sadd.s32 %s116, 1
      %s118 = scalar_select %p115, %s116, %s117
      %p121 = pneg %p115
      %p122 = scmp.eq.s32.totalorder %s17, 1
      %p123 = por %p121, %p122
      %p124 = scmp.ne.s32.totalorder %s116, %s119
      %p125 = scmp.eq.s32.totalorder %s17, 0
      %p126 = por %p124, %p125
      %p127 = scmp.ne.s32.totalorder %s116, %s119
      %p128 = scmp.eq.s32.totalorder %s22, 1
      %p129 = por %p127, %p128
      %p130 = scmp.ne.s32.totalorder %s119, %s120
      %p131 = scmp.eq.s32.totalorder %s22, 0
      %p132 = por %p130, %p131
      %p133 = scmp.ne.s32.totalorder %s119, %s120
      %p134 = scmp.eq.s32.totalorder %s23, 1
      %p135 = por %p133, %p134
      %p137 = scmp.ne.s32.totalorder %s120, %s136
      %p138 = scmp.eq.s32.totalorder %s23, 0
      %p139 = por %p137, %p138
      %p140 = scmp.le.s32.totalorder 1, %s17
      %p141 = scmp.lt.s32.totalorder %s17, 3
      %p142 = pnand %p140, %p141
      %p143 = pneg %p142
      // Predicated region
      $region9: #{tpu_custom_call.1} parent=5 // pred_check
        _
      $region10: #{tpu_custom_call.1} parent=5 // pred_check_branch
        %145 = sbr.rel (%p142) target = $region12
      $region11: #{tpu_custom_call.1} parent=5 // pred_region
        %s146 = ssub.s32 %s17, 1
        // Predicated region
        $region13: #{tpu_custom_call.1} parent=11 // pred_check
          %p147 = pneg %p64
        $region14: #{tpu_custom_call.1} parent=11 // pred_check_branch
          %149 = sbr.rel (%p147) target = $region16
        $region15: #{tpu_custom_call.1} parent=11 // pred_region
          %s151 = ssub.s32 1024, 1024
          %152 = vsyncadd [#allocation6], %s151
          %s153 = sshll.u32 [#allocation5], 4
          %s154 = int_to_ptr.vmem [resolvable:$true] %s153
          %159 = dma.hbm_to_vmem [thread:$0]  %s1, 1024, %s154, [#allocation6], 256, 256, 16
        $region16: #{tpu_custom_call.1} parent=11 // pred_fallthru
          _
        // Predicated region
        $region17: #{tpu_custom_call.1} parent=11 // pred_check
          %p160 = pneg %p85
        $region18: #{tpu_custom_call.1} parent=11 // pred_check_branch
          %162 = sbr.rel (%p160) target = $region20
        $region19: #{tpu_custom_call.1} parent=11 // pred_region
          _
        $region20: #{tpu_custom_call.1} parent=11 // pred_fallthru
          _
        // Predicated region
        $region21: #{tpu_custom_call.1} parent=11 // pred_check
          %p163 = pneg %p106
        $region22: #{tpu_custom_call.1} parent=11 // pred_check_branch
          %165 = sbr.rel (%p163) target = $region24
        $region23: #{tpu_custom_call.1} parent=11 // pred_region
          _
        $region24: #{tpu_custom_call.1} parent=11 // pred_fallthru
          _
      $region12: #{tpu_custom_call.1} parent=5 // pred_fallthru
        _
      %p166 = scmp.lt.s32.totalorder %s17, 2
      // Predicated region
      $region25: #{tpu_custom_call.1} parent=5 // pred_check
        %p167 = pneg %p166
      $region26: #{tpu_custom_call.1} parent=5 // pred_check_branch
        %169 = sbr.rel (%p167) target = $region28
      $region27: #{tpu_custom_call.1} parent=5 // pred_region
        // Predicated region
        $region29: #{tpu_custom_call.1} parent=27 // pred_check
          %p170 = pneg %p37
        $region30: #{tpu_custom_call.1} parent=27 // pred_check_branch
          %172 = sbr.rel (%p170) target = $region32
        $region31: #{tpu_custom_call.1} parent=27 // pred_region
          %s173 = sand.u32 %s27, 1
          %s174 = scalar_lea.sflag [#allocation3], %s173
          %s175 = sand.u32 %s27, 1
          %s176 = smul.addr %s175, 64
          %s177 = scalar_lea.vmem [#allocation2], %s176
          %s179 = ssub.s32 1024, 1024
          %180 = vsyncadd %s174, %s179
          %s181 = smul.addr %s17, 8
          %s182 = smul.addr %s181, 128
          %s183 = scalar_lea.hbm %s0, %s182
          %s184 = sshll.u32 %s177, 4
          %s185 = int_to_ptr.vmem [resolvable:$true] %s184
          %190 = dma.hbm_to_vmem [thread:$0]  %s183, 1024, %s185, %s174, 256, 256, 16
        $region32: #{tpu_custom_call.1} parent=27 // pred_fallthru
          _
      $region28: #{tpu_custom_call.1} parent=5 // pred_fallthru
        _
      %p191 = scmp.le.s32.totalorder 1, %s17
      %p192 = scmp.lt.s32.totalorder %s17, 3
      %p193 = pnand %p191, %p192
      %p194 = pneg %p193
      // Predicated region
      $region33: #{tpu_custom_call.1} parent=5 // pred_check
        _
      $region34: #{tpu_custom_call.1} parent=5 // pred_check_branch
        %196 = sbr.rel (%p193) target = $region36
      $region35: #{tpu_custom_call.1} parent=5 // pred_region
        %s197 = ssub.s32 %s17, 1
        %s198 = sand.u32 %s30, 1
        %s199 = scalar_lea.sflag [#allocation3], %s198
        %s200 = sand.u32 %s30, 1
        %s201 = smul.addr %s200, 64
        %s202 = scalar_lea.vmem [#allocation2], %s201
        // Predicated region
        $region37: #{tpu_custom_call.1} parent=35 // pred_check
          %p203 = pneg %p43
        $region38: #{tpu_custom_call.1} parent=35 // pred_check_branch
          %205 = sbr.rel (%p203) target = $region40
        $region39: #{tpu_custom_call.1} parent=35 // pred_region
          %206 = dma.done %s199, 1024
        $region40: #{tpu_custom_call.1} parent=35 // pred_fallthru
          _
        // Predicated region
        $region41: #{tpu_custom_call.1} parent=35 // pred_check
          %p207 = pneg %p64
        $region42: #{tpu_custom_call.1} parent=35 // pred_check_branch
          %209 = sbr.rel (%p207) target = $region44
        $region43: #{tpu_custom_call.1} parent=35 // pred_region
          %210 = dma.done [#allocation6], 1024
        $region44: #{tpu_custom_call.1} parent=35 // pred_fallthru
          _
        %s211 = sand.u32 %s30, 1
        %s212 = scalar_lea.sflag [#allocation3], %s211
        %s213 = sand.u32 %s30, 1
        %s214 = smul.addr %s213, 64
        %s215 = scalar_lea.vmem [#allocation2], %s214
        %p216 = pneg %p43
        %p217 = pneg %p40
        %p218 = pneg %p64
        %p219 = pneg %p61
        %p220 = pneg %p85
        %p221 = pneg %p82
        %p222 = pneg %p106
        %p223 = pneg %p103
        %p224 = pneg %p132
        %p225 = pneg %p129
        %s226 = sand.u32 %s119, 1
        %s227 = scalar_lea.sflag [#allocation4], %s226
        %s228 = sand.u32 %s119, 1
        %s229 = smul.addr %s228, 64
        %s230 = scalar_lea.vmem [#allocation7], %s229
        %v231 = vld [vmem:[%s202] sm:$0xff]
        %v232 = vld [vmem:[%s202 + $0x8] sm:$0xff]
        %v233 = vld [vmem:[%s202 + $0x10] sm:$0xff]
        %v234 = vld [vmem:[%s202 + $0x18] sm:$0xff]
        %v235 = vld [vmem:[%s202 + $0x20] sm:$0xff]
        %v236 = vld [vmem:[%s202 + $0x28] sm:$0xff]
        %v237 = vld [vmem:[%s202 + $0x30] sm:$0xff]
        %v238 = vld [vmem:[%s202 + $0x38] sm:$0xff]
        %v239 = vld [vmem:[#allocation5] sm:$0xff]
        %v240 = vld [vmem:[#allocation5 + $0x8] sm:$0xff]
        %v241 = vld [vmem:[#allocation5 + $0x10] sm:$0xff]
        %v242 = vld [vmem:[#allocation5 + $0x18] sm:$0xff]
        %v243 = vld [vmem:[#allocation5 + $0x20] sm:$0xff]
        %v244 = vld [vmem:[#allocation5 + $0x28] sm:$0xff]
        %v245 = vld [vmem:[#allocation5 + $0x30] sm:$0xff]
        %v246 = vld [vmem:[#allocation5 + $0x38] sm:$0xff]
        %v247 = vmul.f32 %v231, %v239
        %v248 = vmul.f32 %v232, %v240
        %v249 = vmul.f32 %v233, %v241
        %v250 = vmul.f32 %v234, %v242
        %v251 = vmul.f32 %v235, %v243
        %v252 = vmul.f32 %v236, %v244
        %v253 = vmul.f32 %v237, %v245
        %v254 = vmul.f32 %v238, %v246
        %v255 = vadd.f32 %v247, %v248
        %256 = vadd.xlane.f32.xlu0 %v255
        %v257 = vpop.xlane.xlu0 %256
        %v258 = vadd.f32 %v249, %v250
        %259 = vadd.xlane.f32.xlu0 %v258
        %v260 = vpop.xlane.xlu0 %259
        %v261 = vadd.f32 %v251, %v252
        %262 = vadd.xlane.f32.xlu0 %v261
        %v263 = vpop.xlane.xlu0 %262
        %v264 = vadd.f32 %v253, %v254
        %265 = vadd.xlane.f32.xlu0 %v264
        %v266 = vpop.xlane.xlu0 %265
        %v267 = vld [vmem:[%s2] sm:$0xff]
        %v268 = vld [vmem:[%s2 + $0x8] sm:$0xff]
        %v269 = vld [vmem:[%s2 + $0x10] sm:$0xff]
        %v270 = vld [vmem:[%s2 + $0x18] sm:$0xff]
        %v275 = vlaneseq
        %v276 = vand.u32 %v275, 127
        %v277 = vlaneseq
        %v278 = vshrl.u32 %v277, 7
        %v279 = vsub.s32 %v276, %v278
        %v280 = vrot.slane %v257, %v279
        %v281 = vadd.s32 %v276, 4294967288
        %v282 = vlaneseq
        %v283 = vshrl.u32 %v282, 7
        %v284 = vsub.s32 %v281, %v283
        %v285 = vrot.slane %v260, %v284
        %vm286 = vcmask 130112
        %v287 = vsel %vm286, %v285, %v280
        %v288 = vadd.s32 %v276, 4294967280
        %v289 = vlaneseq
        %v290 = vshrl.u32 %v289, 7
        %v291 = vsub.s32 %v288, %v290
        %v292 = vrot.slane %v263, %v291
        %vm293 = vcmask 195712
        %v294 = vsel %vm293, %v292, %v287
        %v295 = vadd.s32 %v276, 4294967272
        %v296 = vlaneseq
        %v297 = vshrl.u32 %v296, 7
        %v298 = vsub.s32 %v295, %v297
        %v299 = vrot.slane %v266, %v298
        %vm300 = vcmask 261312
        %v301 = vsel %vm300, %v299, %v294
        %vm302 = vcmask 261120
        %v303 = vsel %vm302, %v301, 0
        %305 = vmatprep.subr.mxu0 0.0
        %306 = vmatpush1.msra.mxu0 0.0
        %307 = vmatprep.subr.mxu0 0.0
        %308 = vmatpush1.msra.mxu0 0.0
        %309 = vmatprep.subr.mxu0 0.0
        %310 = vmatpush1.msra.mxu0 0.0
        %311 = vmatprep.subr.mxu0 0.0
        %312 = vmatpush1.msra.mxu0 0.0
        %313 = vmatprep.subr.mxu0 0.0
        %314 = vmatpush1.msra.mxu0 0.0
        %315 = vmatprep.subr.mxu0 0.0
        %316 = vmatpush1.msra.mxu0 0.0
        %317 = vmatprep.subr.mxu0 0.0
        %318 = vmatpush1.msra.mxu0 0.0
        %319 = vmatprep.subr.mxu0 0.0
        %320 = vmatpush1.msra.mxu0 0.0
        %321 = vmatprep.subr.mxu0 0.0
        %322 = vmatpush1.msra.mxu0 0.0
        %323 = vmatprep.subr.mxu0 0.0
        %324 = vmatpush1.msra.mxu0 0.0
        %325 = vmatprep.subr.mxu0 0.0
        %326 = vmatpush1.msra.mxu0 0.0
        %327 = vmatprep.subr.mxu0 0.0
        %328 = vmatpush1.msra.mxu0 0.0
        %329 = vmatprep.subr.mxu0 0.0
        %330 = vmatpush1.msra.mxu0 %v270
        %331 = vmatprep.subr.mxu0 0.0
        %332 = vmatpush1.msra.mxu0 %v269
        %333 = vmatprep.subr.mxu0 0.0
        %334 = vmatpush1.msra.mxu0 %v268
        %335 = vmatprep.subr.mxu0 0.0
        %336 = vmatpush1.msra.mxu0 %v267
        %337 = vmatprep.subr.mxu0 0.0
        %338 = vmatpush2.msra.mxu0 0.0
        %339 = vmatprep.subr.mxu0 0.0
        %340 = vmatpush2.msra.mxu0 0.0
        %341 = vmatprep.subr.mxu0 0.0
        %342 = vmatpush2.msra.mxu0 0.0
        %343 = vmatprep.subr.mxu0 0.0
        %344 = vmatpush2.msra.mxu0 0.0
        %345 = vmatprep.subr.mxu0 0.0
        %346 = vmatpush2.msra.mxu0 0.0
        %347 = vmatprep.subr.mxu0 0.0
        %348 = vmatpush2.msra.mxu0 0.0
        %349 = vmatprep.subr.mxu0 0.0
        %350 = vmatpush2.msra.mxu0 0.0
        %351 = vmatprep.subr.mxu0 0.0
        %352 = vmatpush2.msra.mxu0 0.0
        %353 = vmatprep.subr.mxu0 0.0
        %354 = vmatpush2.msra.mxu0 0.0
        %355 = vmatprep.subr.mxu0 0.0
        %356 = vmatpush2.msra.mxu0 0.0
        %357 = vmatprep.subr.mxu0 0.0
        %358 = vmatpush2.msra.mxu0 0.0
        %359 = vmatprep.subr.mxu0 0.0
        %360 = vmatpush2.msra.mxu0 0.0
        %361 = vmatprep.subr.mxu0 0.0
        %362 = vmatpush2.msra.mxu0 0.0
        %363 = vmatprep.subr.mxu0 0.0
        %364 = vmatpush2.msra.mxu0 0.0
        %365 = vmatprep.subr.mxu0 0.0
        %366 = vmatpush2.msra.mxu0 0.0
        %367 = vmatprep.subr.mxu0 0.0
        %368 = vmatpush2.msra.mxu0 0.0
        %369 = vmatprep.mubr.f32.mxu0 0.0
        %370 = vmatmul.mubr.f32.gmra.mxu0 %v303
        %v371 = vpop.f32.mrf.mxu0
        %v372 = vadd.f32 0.0, %v371
        %v373 = vpop.f32.mrf.mxu0
        %374 = vdwg.mxu0
        %v375 = vmax.f32 %v372, 0.0
        %v376 = vld [vmem:[%s3] sm:$0x3]
        %vm377 = vcmask 15360
        %v379 = vsel %vm377, %v375, 0
        %vm381 = vcmask 1041408
        %v383 = vsel %vm381, %v376, 0
        %385 = vmatprep.subr.mxu0 0.0
        %386 = vmatpush1.msra.mxu0 0.0
        %387 = vmatprep.subr.mxu0 0.0
        %388 = vmatpush1.msra.mxu0 0.0
        %389 = vmatprep.subr.mxu0 0.0
        %390 = vmatpush1.msra.mxu0 0.0
        %391 = vmatprep.subr.mxu0 0.0
        %392 = vmatpush1.msra.mxu0 0.0
        %393 = vmatprep.subr.mxu0 0.0
        %394 = vmatpush1.msra.mxu0 0.0
        %395 = vmatprep.subr.mxu0 0.0
        %396 = vmatpush1.msra.mxu0 0.0
        %397 = vmatprep.subr.mxu0 0.0
        %398 = vmatpush1.msra.mxu0 0.0
        %399 = vmatprep.subr.mxu0 0.0
        %400 = vmatpush1.msra.mxu0 0.0
        %401 = vmatprep.subr.mxu0 0.0
        %402 = vmatpush1.msra.mxu0 0.0
        %403 = vmatprep.subr.mxu0 0.0
        %404 = vmatpush1.msra.mxu0 0.0
        %405 = vmatprep.subr.mxu0 0.0
        %406 = vmatpush1.msra.mxu0 0.0
        %407 = vmatprep.subr.mxu0 0.0
        %408 = vmatpush1.msra.mxu0 0.0
        %409 = vmatprep.subr.mxu0 0.0
        %410 = vmatpush1.msra.mxu0 0.0
        %411 = vmatprep.subr.mxu0 0.0
        %412 = vmatpush1.msra.mxu0 0.0
        %413 = vmatprep.subr.mxu0 0.0
        %414 = vmatpush1.msra.mxu0 0.0
        %415 = vmatprep.subr.mxu0 0.0
        %416 = vmatpush1.msra.mxu0 %v383
        %417 = vmatprep.subr.mxu0 0.0
        %418 = vmatpush2.msra.mxu0 0.0
        %419 = vmatprep.subr.mxu0 0.0
        %420 = vmatpush2.msra.mxu0 0.0
        %421 = vmatprep.subr.mxu0 0.0
        %422 = vmatpush2.msra.mxu0 0.0
        %423 = vmatprep.subr.mxu0 0.0
        %424 = vmatpush2.msra.mxu0 0.0
        %425 = vmatprep.subr.mxu0 0.0
        %426 = vmatpush2.msra.mxu0 0.0
        %427 = vmatprep.subr.mxu0 0.0
        %428 = vmatpush2.msra.mxu0 0.0
        %429 = vmatprep.subr.mxu0 0.0
        %430 = vmatpush2.msra.mxu0 0.0
        %431 = vmatprep.subr.mxu0 0.0
        %432 = vmatpush2.msra.mxu0 0.0
        %433 = vmatprep.subr.mxu0 0.0
        %434 = vmatpush2.msra.mxu0 0.0
        %435 = vmatprep.subr.mxu0 0.0
        %436 = vmatpush2.msra.mxu0 0.0
        %437 = vmatprep.subr.mxu0 0.0
        %438 = vmatpush2.msra.mxu0 0.0
        %439 = vmatprep.subr.mxu0 0.0
        %440 = vmatpush2.msra.mxu0 0.0
        %441 = vmatprep.subr.mxu0 0.0
        %442 = vmatpush2.msra.mxu0 0.0
        %443 = vmatprep.subr.mxu0 0.0
        %444 = vmatpush2.msra.mxu0 0.0
        %445 = vmatprep.subr.mxu0 0.0
        %446 = vmatpush2.msra.mxu0 0.0
        %447 = vmatprep.subr.mxu0 0.0
        %448 = vmatpush2.msra.mxu0 0.0
        %449 = vmatprep.mubr.f32.mxu0 0.0
        %450 = vmatmul.mubr.f32.gmra.mxu0 %v379
        %v451 = vpop.f32.mrf.mxu0
        %v452 = vadd.f32 0.0, %v451
        %v453 = vpop.f32.mrf.mxu0
        %454 = vdwg.mxu0
        %v455 = vxor.u32 %v452, 2147483648
        %v456 = vmul.f32 %v455, 1.442695
        %v457 = vpow.pop %v456
        %v458 = vadd.f32 %v457, 1.0
        %v459 = vrcp.pop %v458
        %v460 = vmul.f32 1.0, %v459
        %v461 = vlaneseq
        %v462 = vshrl.u32 %v461, 7
        %v463 = vsub.s32 0, %v462
        %v464 = vrot.slane %v460, %v463
        %466 = vbcast.lane.b32.xlu0 %v464, 256
        %v467 = vpop.permute.xlu0 %466
        %s469 = sor.u32 256, 8
        %470 = vbcast.lane.b32.xlu0 %v464, %s469
        %v471 = vpop.permute.xlu0 %470
        %s473 = sor.u32 256, 16
        %474 = vbcast.lane.b32.xlu0 %v464, %s473
        %v475 = vpop.permute.xlu0 %474
        %s477 = sor.u32 256, 24
        %478 = vbcast.lane.b32.xlu0 %v464, %s477
        %v479 = vpop.permute.xlu0 %478
        %v480 = vmul.f32 %v231, %v467
        %v481 = vmul.f32 %v232, %v467
        %v482 = vmul.f32 %v233, %v471
        %v483 = vmul.f32 %v234, %v471
        %v484 = vmul.f32 %v235, %v475
        %v485 = vmul.f32 %v236, %v475
        %v486 = vmul.f32 %v237, %v479
        %v487 = vmul.f32 %v238, %v479
        %488 = vst [vmem:[%s230] sm:$0xff] %v480
        %489 = vst [vmem:[%s230 + $0x8] sm:$0xff] %v481
        %490 = vst [vmem:[%s230 + $0x10] sm:$0xff] %v482
        %491 = vst [vmem:[%s230 + $0x18] sm:$0xff] %v483
        %492 = vst [vmem:[%s230 + $0x20] sm:$0xff] %v484
        %493 = vst [vmem:[%s230 + $0x28] sm:$0xff] %v485
        %494 = vst [vmem:[%s230 + $0x30] sm:$0xff] %v486
        %495 = vst [vmem:[%s230 + $0x38] sm:$0xff] %v487
        %s496 = sand.u32 %s119, 1
        %s497 = scalar_lea.sflag [#allocation4], %s496
        %s498 = sand.u32 %s119, 1
        %s499 = smul.addr %s498, 64
        %s500 = scalar_lea.vmem [#allocation7], %s499
        // Predicated region
        $region45: #{tpu_custom_call.1} parent=35 // pred_check
          %p501 = pneg %p129
        $region46: #{tpu_custom_call.1} parent=35 // pred_check_branch
          %503 = sbr.rel (%p501) target = $region48
        $region47: #{tpu_custom_call.1} parent=35 // pred_region
          %s505 = ssub.s32 1024, 1024
          %506 = vsyncadd %s497, %s505
          %s507 = smul.addr %s22, 8
          %s508 = smul.addr %s507, 128
          %s509 = scalar_lea.hbm %s4, %s508
          %s510 = sshll.u32 %s500, 4
          %s511 = int_to_ptr.vmem [resolvable:$true] %s510
          %516 = dma.vmem_to_hbm [thread:$0]  %s511, 1024, %s509, %s497, 256, 256, 16
        $region48: #{tpu_custom_call.1} parent=35 // pred_fallthru
          _
      $region36: #{tpu_custom_call.1} parent=5 // pred_fallthru
        _
      %p517 = scmp.le.s32.totalorder 2, %s17
      // Predicated region
      $region49: #{tpu_custom_call.1} parent=5 // pred_check
        %p518 = pneg %p517
      $region50: #{tpu_custom_call.1} parent=5 // pred_check_branch
        %520 = sbr.rel (%p518) target = $region52
      $region51: #{tpu_custom_call.1} parent=5 // pred_region
        %s521 = ssub.s32 %s17, 2
        // Predicated region
        $region53: #{tpu_custom_call.1} parent=51 // pred_check
          %p522 = pneg %p135
        $region54: #{tpu_custom_call.1} parent=51 // pred_check_branch
          %524 = sbr.rel (%p522) target = $region56
        $region55: #{tpu_custom_call.1} parent=51 // pred_region
          %s525 = sand.u32 %s120, 1
          %s526 = scalar_lea.sflag [#allocation4], %s525
          %s527 = sand.u32 %s120, 1
          %s528 = smul.addr %s527, 64
          %s529 = scalar_lea.vmem [#allocation7], %s528
          %530 = dma.done %s526, 1024
        $region56: #{tpu_custom_call.1} parent=51 // pred_fallthru
          _
      $region52: #{tpu_custom_call.1} parent=5 // pred_fallthru
        _
    $region6: #{tpu_custom_call.1} parent=1 // loop_footer
      %s21 = sadd.s32 1, %s17
    $region7: #{tpu_custom_call.1} parent=1 // loop_footer_branch
      %16 = sbr.rel target = $region3
    $region8: #{tpu_custom_call.1} parent=1 // loop_exit
      _
    %531 = vsyncpa [#allocation3], 1
    %s532 = scalar_lea.sflag [#allocation3], 1
    %533 = vsyncpa %s532, 1
    %534 = vsyncpa [#allocation6], 1
    %535 = vsyncpa [#allocation4], 1
    %s536 = scalar_lea.sflag [#allocation4], 1
    %537 = vsyncpa %s536, 1

</llo_original>
